<compile_context>
chip_gen: v6e
topology: v6e:2x2x1
jax: 0.10.0
libtpu: 0.0.40
codegen_flags: <defaults>
</compile_context>

<pallas_src>
import functools

import jax
import jax.numpy as jnp
import numpy as np
from jax.experimental import pallas as pl
from jax.experimental.pallas import tpu as pltpu

DT = 1e-3  # norse default time step

# raw parameter-row indices in the user-facing [8, H] parameter slab
P_W_IN, P_TAU_SYN_INV, P_SYN_V_LEAK, P_R, P_TAU_MEM_INV, P_LIF_V_LEAK, P_V_TH, P_V_RESET = range(8)

# fused parameter-row indices in the kernel-facing [8, H] slab
F_A_S, F_B_S, F_C_S, F_A_M, F_B_M, F_D_M, F_V_TH, F_V_RESET = range(8)


def _vmem_budget_and_limit():
    """Generation-specific (double-buffered stream budget, scoped VMEM limit) in bytes."""
    try:
        cap = int(pltpu.get_tpu_info().vmem_capacity_bytes)
    except Exception:
        cap = None
    if cap is not None and cap >= 96 * 1024 * 1024:
        # v5e / v6e: 128 MiB physical VMEM -> big tiles, raise the scoped limit.
        return 48 * 1024 * 1024, 64 * 1024 * 1024
    # v7x (64 MiB per TensorCore) or unknown hardware: stay within the 32 MiB
    # default scoped limit so we never OOM/spill.
    return 24 * 1024 * 1024, 32 * 1024 * 1024


def _choose_tiles(B, H, budget_bytes):
    """Pick (tb, th): largest lane-dense block whose 6 double-buffered f32 streams
    fit `budget_bytes`.  Assumes H % 128 == 0 and (B % 32 == 0 or B is small and
    used as a full-extent block).  Size-gates the two-TensorCore split."""
    # hidden tile: largest multiple of 128 dividing H, capped at 4096 lanes
    th_cap = min(H, 4096)
    th = 128
    for cand in range(th_cap, 127, -128):
        if H % cand == 0:
            th = cand
            break

    bytes_per_row = 6 * 2 * th * 4            # 6 I/O streams x 2 buffers, f32 (conservative)
    max_rows = max(8, budget_bytes // max(bytes_per_row, 1))

    if B % 32 != 0:
        tb = B                                # full-extent block is always legal (tiny B only)
    else:
        cap = max(32, min(B, (max_rows // 32) * 32))
        tb = 32
        for cand in range(cap, 31, -32):
            if B % cand == 0:
                tb = cand
                break

    # Size-gated split so both v7x TensorCores get work on big single-block problems.
    if (B // tb) * (H // th) == 1:
        per_stream_bytes = tb * th * 4
        if per_stream_bytes >= 512 * 1024:
            if tb >= th and tb % 64 == 0:
                tb //= 2                      # prefer splitting the larger axis
            elif th % 256 == 0:
                th //= 2
            elif tb % 64 == 0:
                tb //= 2
    return tb, th


def _cuba_lif_kernel(x_ref, vsyn_ref, vmem_ref, p_ref,
                     z_ref, vsyn_out_ref, vmem_out_ref):
    f32 = jnp.float32
    x = x_ref[...].astype(f32)
    v_syn = vsyn_ref[...].astype(f32)
    v_mem = vmem_ref[...].astype(f32)

    # fused per-neuron coefficients, kept as [1, th] rows (broadcast over batch)
    a_s = p_ref[F_A_S:F_A_S + 1, :]
    b_s = p_ref[F_B_S:F_B_S + 1, :]
    c_s = p_ref[F_C_S:F_C_S + 1, :]
    a_m = p_ref[F_A_M:F_A_M + 1, :]
    b_m = p_ref[F_B_M:F_B_M + 1, :]
    d_m = p_ref[F_D_M:F_D_M + 1, :]
    v_th = p_ref[F_V_TH:F_V_TH + 1, :]
    v_reset = p_ref[F_V_RESET:F_V_RESET + 1, :]

    # synapse (LIBox) step, fused form
    v_syn_new = a_s * v_syn + c_s * x + b_s
    # membrane (LIFBox) step, fused form
    v_dec = a_m * v_mem + d_m * v_syn_new + b_m

    # heaviside spike + reset via selects (no (1-z) arithmetic)
    spike = v_dec > v_th
    z_ref[...] = spike.astype(z_ref.dtype)                       # exact {0, 1} in int8
    vsyn_out_ref[...] = v_syn_new.astype(vsyn_out_ref.dtype)
    vmem_out_ref[...] = jnp.where(spike, v_reset, v_dec).astype(vmem_out_ref.dtype)


def _fuse_params(params):
    """Fold dt / leaks / gains into 6 per-neuron coefficients (exact rewrite)."""
    w_in = params[P_W_IN]
    tau_syn_inv = params[P_TAU_SYN_INV]
    syn_v_leak = params[P_SYN_V_LEAK]
    r = params[P_R]
    tau_mem_inv = params[P_TAU_MEM_INV]
    lif_v_leak = params[P_LIF_V_LEAK]
    v_th = params[P_V_TH]
    v_reset = params[P_V_RESET]

    ks = DT * tau_syn_inv
    km = DT * tau_mem_inv
    fused = jnp.stack([
        1.0 - ks,            # a_s
        ks * syn_v_leak,     # b_s
        ks * w_in,           # c_s
        1.0 - km,            # a_m
        km * lif_v_leak,     # b_m
        km * r,              # d_m
        v_th,
        v_reset,
    ], axis=0)
    return fused.astype(jnp.float32)


@functools.partial(jax.jit, donate_argnums=(1, 2))
def _cuba_lif_step(x, v_syn, v_mem, fused_params):
    """One CubaLIF step on padded, tile-friendly shapes.
    x, v_syn, v_mem: [B, H]; fused_params: [8, H] f32.  Returns (z:int8, v_syn', v_mem')."""
    B, H = x.shape
    budget, vmem_limit = _vmem_budget_and_limit()
    tb, th = _choose_tiles(B, H, budget)
    assert B % tb == 0 and H % th == 0

    # Batch is the INNERMOST grid axis; the param block index depends only on the
    # outer (hidden) axis, so it stays VMEM-resident across the batch sweep.
    io_spec = pl.BlockSpec((tb, th), lambda j, i: (i, j))
    param_spec = pl.BlockSpec((8, th), lambda j, i: (0, j))

    out_shape = (
        jax.ShapeDtypeStruct((B, H), jnp.int8),       # spikes: exactly {0,1}
        jax.ShapeDtypeStruct((B, H), v_syn.dtype),
        jax.ShapeDtypeStruct((B, H), v_mem.dtype),
    )

    return pl.pallas_call(
        _cuba_lif_kernel,
        out_shape=out_shape,
        grid_spec=pltpu.PrefetchScalarGridSpec(
            num_scalar_prefetch=0,
            grid=(H // th, B // tb),
            in_specs=[io_spec, io_spec, io_spec, param_spec],
            out_specs=[io_spec, io_spec, io_spec],
        ),
        # v_syn / v_mem are updated in place (state buffers donated by the jit wrapper).
        input_output_aliases={1: 1, 2: 2},
        compiler_params=pltpu.CompilerParams(
            dimension_semantics=("parallel", "parallel"),
            vmem_limit_bytes=vmem_limit,
        ),
    )(x, v_syn, v_mem, fused_params)


def _pad2(a, rows, cols):
    r, c = a.shape
    if r == rows and c == cols:
        return a
    return jnp.pad(a, ((0, rows - r), (0, cols - c)))


def cuba_lif_forward(x, params, state=None, io_dtype=None):
    """Mirrors CubaLIF.forward: returns (z, (syn_state_v, lif_state_v)).

    `params` is the raw [8, H] slab with rows
    (w_in, tau_syn_inv, syn_v_leak, r, tau_mem_inv, lif_v_leak, v_th, v_reset).
    `z` is returned as int8 with values exactly {0, 1} (cast downstream if a float
    spike tensor is required).  `io_dtype=jnp.bfloat16` optionally halves state
    HBM traffic (math stays f32 in-kernel; numerics deviate slightly from f32).
    """
    B, H = x.shape
    if state is None:
        # norse default initial states: LIBox v = syn v_leak, LIFBox v = lif v_leak
        v_syn0 = jnp.broadcast_to(params[P_SYN_V_LEAK], (B, H)).astype(x.dtype)
        v_mem0 = jnp.broadcast_to(params[P_LIF_V_LEAK], (B, H)).astype(x.dtype)
    else:
        v_syn0, v_mem0 = state

    fused = _fuse_params(params)

    if io_dtype is not None:
        x = x.astype(io_dtype)
        v_syn0 = v_syn0.astype(io_dtype)
        v_mem0 = v_mem0.astype(io_dtype)

    # Pad to lane/sublane-friendly shapes so stores are unmasked and tiles legal:
    # H -> multiple of 128; B -> multiple of 32 when B >= 32 (int8 spike tiles),
    # else keep B and use a full-extent batch block.
    H_pad = -(-H // 128) * 128
    B_pad = B if B < 32 else -(-B // 32) * 32
    xp = _pad2(x, B_pad, H_pad)
    vsp = _pad2(v_syn0, B_pad, H_pad)
    vmp = _pad2(v_mem0, B_pad, H_pad)
    fp = _pad2(fused, 8, H_pad)

    z, v_syn_new, v_mem_new = _cuba_lif_step(xp, vsp, vmp, fp)

    if (B_pad, H_pad) != (B, H):
        z = z[:B, :H]
        v_syn_new = v_syn_new[:B, :H]
        v_mem_new = v_mem_new[:B, :H]
    return z, (v_syn_new, v_mem_new)


def _reference(x, params, v_syn, v_mem):
    """Module-faithful (unfused) math, matching the PyTorch/norse forward."""
    w_in, tau_syn_inv, syn_v_leak, r, tau_mem_inv, lif_v_leak, v_th, v_reset = params
    i_in = w_in * x
    v_syn_new = v_syn + DT * tau_syn_inv * ((syn_v_leak - v_syn) + i_in)
    cur = r * v_syn_new
    v_dec = v_mem + DT * tau_mem_inv * ((lif_v_leak - v_mem) + cur)
    z = (v_dec - v_th > 0.0).astype(x.dtype)
    v_mem_new = (1.0 - z) * v_dec + z * v_reset
    return z, v_syn_new, v_mem_new


if __name__ == "__main__":
    B, H = 8, 128  # batch=8, hidden=128 neurons (small demo shapes)

    key = jax.random.PRNGKey(0)
    kx, kp = jax.random.split(key)
    # scale inputs up so some neurons actually cross threshold in one step
    x = jax.random.normal(kx, (B, H), dtype=jnp.float32) * 2000.0

    # Deterministic per-neuron parameters (synthetic; NIR CubaLIF stores per-neuron arrays).
    n = jnp.arange(H, dtype=jnp.float32)
    params = jnp.stack([
        jnp.ones((H,), jnp.float32),                 # w_in
        200.0 + 2.0 * n,                             # tau_syn_inv = 1 / tau_syn
        jnp.zeros((H,), jnp.float32),                # synapse v_leak (zeros, per norse import)
        0.5 + 0.001 * n,                             # r
        100.0 + 1.0 * n,                             # tau_mem_inv = 1 / tau_mem
        0.01 * jnp.ones((H,), jnp.float32),          # lif v_leak
        0.05 * jnp.ones((H,), jnp.float32),          # v_th
        jnp.zeros((H,), jnp.float32),                # v_reset
    ], axis=0)  # [8, H]

    z, (v_syn, v_mem) = cuba_lif_forward(x, params, state=None)
    jax.block_until_ready((z, v_syn, v_mem))

    # cross-check against a pure-JAX reference of the original (unfused) math
    # (rebuild the default initial state here; the kernel's copy was donated/updated in place)
    v_syn0 = jnp.broadcast_to(params[P_SYN_V_LEAK], (B, H))
    v_mem0 = jnp.broadcast_to(params[P_LIF_V_LEAK], (B, H))
    z_ref, vs_ref, vm_ref = _reference(
        x, [params[i][None, :] for i in range(8)], v_syn0, v_mem0)
    np.testing.assert_array_equal(np.asarray(z, dtype=np.float32), np.asarray(z_ref))
    np.testing.assert_allclose(np.asarray(v_syn), np.asarray(vs_ref), rtol=1e-5, atol=1e-4)
    np.testing.assert_allclose(np.asarray(v_mem), np.asarray(vm_ref), rtol=1e-5, atol=1e-4)

    print("KERNEL_OK")
</pallas_src>

<mosaic_0001>
module attributes {stable_mosaic.version = 11 : i64} {
  func.func @_cuba_lif_kernel(%arg0: i32, %arg1: i32, %arg2: memref<8x128xf32, #tpu.memory_space<vmem>>, %arg3: memref<8x128xf32, #tpu.memory_space<vmem>>, %arg4: memref<8x128xf32, #tpu.memory_space<vmem>>, %arg5: memref<8x128xf32, #tpu.memory_space<vmem>>, %arg6: memref<8x128xi8, #tpu.memory_space<vmem>>, %arg7: memref<8x128xf32, #tpu.memory_space<vmem>>, %arg8: memref<8x128xf32, #tpu.memory_space<vmem>>) attributes {dimension_semantics = [#tpu.dimension_semantics<parallel>, #tpu.dimension_semantics<parallel>], iteration_bounds = array<i64: 1, 1>, scalar_prefetch = 0 : i64, scratch_operands = 0 : i64, tpu.core_type = #tpu.core_type<tc>, window_params = [{transform_indices = @transform_0, window_bounds = array<i64: 8, 128>}, {transform_indices = @transform_1, window_bounds = array<i64: 8, 128>}, {transform_indices = @transform_2, window_bounds = array<i64: 8, 128>}, {transform_indices = @transform_3, window_bounds = array<i64: 8, 128>}, {transform_indices = @transform_4, window_bounds = array<i64: 8, 128>}, {transform_indices = @transform_5, window_bounds = array<i64: 8, 128>}, {transform_indices = @transform_6, window_bounds = array<i64: 8, 128>}]} {
    %c0 = arith.constant 0 : index
    %c0_0 = arith.constant 0 : index
    %0 = vector.load %arg2[%c0, %c0_0] : memref<8x128xf32, #tpu.memory_space<vmem>>, vector<8x128xf32>
    %c0_1 = arith.constant 0 : index
    %c0_2 = arith.constant 0 : index
    %1 = vector.load %arg3[%c0_1, %c0_2] : memref<8x128xf32, #tpu.memory_space<vmem>>, vector<8x128xf32>
    %c0_3 = arith.constant 0 : index
    %c0_4 = arith.constant 0 : index
    %2 = vector.load %arg4[%c0_3, %c0_4] : memref<8x128xf32, #tpu.memory_space<vmem>>, vector<8x128xf32>
    %c0_5 = arith.constant 0 : index
    %c0_6 = arith.constant 0 : index
    %3 = vector.load %arg5[%c0_5, %c0_6] : memref<8x128xf32, #tpu.memory_space<vmem>>, vector<1x128xf32>
    %c1 = arith.constant 1 : index
    %c0_7 = arith.constant 0 : index
    %4 = vector.load %arg5[%c1, %c0_7] : memref<8x128xf32, #tpu.memory_space<vmem>>, vector<1x128xf32>
    %c2 = arith.constant 2 : index
    %c0_8 = arith.constant 0 : index
    %5 = vector.load %arg5[%c2, %c0_8] : memref<8x128xf32, #tpu.memory_space<vmem>>, vector<1x128xf32>
    %c3 = arith.constant 3 : index
    %c0_9 = arith.constant 0 : index
    %6 = vector.load %arg5[%c3, %c0_9] : memref<8x128xf32, #tpu.memory_space<vmem>>, vector<1x128xf32>
    %c4 = arith.constant 4 : index
    %c0_10 = arith.constant 0 : index
    %7 = vector.load %arg5[%c4, %c0_10] : memref<8x128xf32, #tpu.memory_space<vmem>>, vector<1x128xf32>
    %c5 = arith.constant 5 : index
    %c0_11 = arith.constant 0 : index
    %8 = vector.load %arg5[%c5, %c0_11] : memref<8x128xf32, #tpu.memory_space<vmem>>, vector<1x128xf32>
    %c6 = arith.constant 6 : index
    %c0_12 = arith.constant 0 : index
    %9 = vector.load %arg5[%c6, %c0_12] : memref<8x128xf32, #tpu.memory_space<vmem>>, vector<1x128xf32>
    %c7 = arith.constant 7 : index
    %c0_13 = arith.constant 0 : index
    %10 = vector.load %arg5[%c7, %c0_13] : memref<8x128xf32, #tpu.memory_space<vmem>>, vector<1x128xf32>
    %11 = vector.broadcast %3 : vector<1x128xf32> to vector<8x128xf32>
    %12 = arith.mulf %11, %1 : vector<8x128xf32>
    %13 = vector.broadcast %5 : vector<1x128xf32> to vector<8x128xf32>
    %14 = arith.mulf %13, %0 : vector<8x128xf32>
    %15 = arith.addf %12, %14 : vector<8x128xf32>
    %16 = vector.broadcast %4 : vector<1x128xf32> to vector<8x128xf32>
    %17 = arith.addf %15, %16 : vector<8x128xf32>
    %18 = vector.broadcast %6 : vector<1x128xf32> to vector<8x128xf32>
    %19 = arith.mulf %18, %2 : vector<8x128xf32>
    %20 = vector.broadcast %8 : vector<1x128xf32> to vector<8x128xf32>
    %21 = arith.mulf %20, %17 : vector<8x128xf32>
    %22 = arith.addf %19, %21 : vector<8x128xf32>
    %23 = vector.broadcast %7 : vector<1x128xf32> to vector<8x128xf32>
    %24 = arith.addf %22, %23 : vector<8x128xf32>
    %25 = vector.broadcast %9 : vector<1x128xf32> to vector<8x128xf32>
    %26 = arith.cmpf ogt, %24, %25 : vector<8x128xf32>
    %27 = arith.extui %26 : vector<8x128xi1> to vector<8x128xi8>
    %c0_14 = arith.constant 0 : index
    %c0_15 = arith.constant 0 : index
    %28 = vector.load %arg6[%c0_14, %c0_15] : memref<8x128xi8, #tpu.memory_space<vmem>>, vector<8x128xi8>
    tpu.vector_store %arg6[%c0_14, %c0_15], %27 {strides = array<i32>} : memref<8x128xi8, #tpu.memory_space<vmem>>, vector<8x128xi8>,
    %c0_16 = arith.constant 0 : index
    %c0_17 = arith.constant 0 : index
    %29 = vector.load %arg7[%c0_16, %c0_17] : memref<8x128xf32, #tpu.memory_space<vmem>>, vector<8x128xf32>
    tpu.vector_store %arg7[%c0_16, %c0_17], %17 {strides = array<i32>} : memref<8x128xf32, #tpu.memory_space<vmem>>, vector<8x128xf32>,
    %30 = vector.shape_cast %10 : vector<1x128xf32> to vector<1x128xf32>
    %31 = vector.broadcast %30 : vector<1x128xf32> to vector<8x128xf32>
    %32 = arith.select %26, %31, %24 : vector<8x128xi1>, vector<8x128xf32>
    %c0_18 = arith.constant 0 : index
    %c0_19 = arith.constant 0 : index
    %33 = vector.load %arg8[%c0_18, %c0_19] : memref<8x128xf32, #tpu.memory_space<vmem>>, vector<8x128xf32>
    tpu.vector_store %arg8[%c0_18, %c0_19], %32 {strides = array<i32>} : memref<8x128xf32, #tpu.memory_space<vmem>>, vector<8x128xf32>,
    return
  }
  func.func @transform_0(%arg0: i32, %arg1: i32) -> (i32, i32) {
    %c0_i32 = arith.constant 0 : i32
    return %arg1, %arg0 : i32, i32
  }
  func.func @transform_1(%arg0: i32, %arg1: i32) -> (i32, i32) {
    %c0_i32 = arith.constant 0 : i32
    return %arg1, %arg0 : i32, i32
  }
  func.func @transform_2(%arg0: i32, %arg1: i32) -> (i32, i32) {
    %c0_i32 = arith.constant 0 : i32
    return %arg1, %arg0 : i32, i32
  }
  func.func @transform_3(%arg0: i32, %arg1: i32) -> (i32, i32) {
    %c0_i32 = arith.constant 0 : i32
    %c0_i32_0 = arith.constant 0 : i32
    return %c0_i32, %arg0 : i32, i32
  }
  func.func @transform_4(%arg0: i32, %arg1: i32) -> (i32, i32) {
    %c0_i32 = arith.constant 0 : i32
    return %arg1, %arg0 : i32, i32
  }
  func.func @transform_5(%arg0: i32, %arg1: i32) -> (i32, i32) {
    %c0_i32 = arith.constant 0 : i32
    return %arg1, %arg0 : i32, i32
  }
  func.func @transform_6(%arg0: i32, %arg1: i32) -> (i32, i32) {
    %c0_i32 = arith.constant 0 : i32
    return %arg1, %arg0 : i32, i32
  }
}

</mosaic_0001>

<llo_original>
// kernel: _cuba_lif_step.1
$region0: #{_cuba_lif_step.1}
  #allocation0 [shape = 'u32[]', space=smem, size = 0x4, offset = 0x4, fixed_abs, tag = 'smem constant byte address 0x4 - core index']
  #allocation1 [shape = 'u32[144,128]{1,0:T(1,128)}', space=vmem, size = 0x12000, scoped, tag = 'internal scratch']
  %s0 = inlined_call_operand.hbm [shape: f32[8,128], index: 0, kind: input, shape index: {}]
  %s1 = inlined_call_operand.hbm [shape: f32[8,128], index: 1, kind: input, shape index: {}, may-alias: {1,5}]
  %s2 = inlined_call_operand.hbm [shape: f32[8,128], index: 2, kind: input, shape index: {}, may-alias: {2,6}]
  %s3 = inlined_call_operand.hbm [shape: f32[8,128], index: 3, kind: input, shape index: {}]
  %s4 = inlined_call_operand.hbm [shape: s8[8,128], index: 4, kind: output, shape index: {0}]
  %s5 = inlined_call_operand.hbm [shape: f32[8,128], index: 5, kind: output, shape index: {1}, may-alias: {1,5}]
  %s6 = inlined_call_operand.hbm [shape: f32[8,128], index: 6, kind: output, shape index: {2}, may-alias: {2,6}]
  %7 = xla_tuple %s4, %s5, %s6
  %s8 = sld [smem:[#allocation0]]
  $region58: #{_cuba_lif_step.1} parent=0
    _
  %s10 = ssub.s32 1, %s8
  %s11 = scalar_select 0, %s10, %s8
  $region1: #{_cuba_lif_step.1} parent=0
    #allocation2 [shape = 'u8[4096]{0}', space=vmem, size = 0x1000, scoped, tag = 'input window, operand 0, single buffered']
    #allocation3 [shape = 's32[1]{0}', space=sflag, size = 0x4, scoped, tag = 'scoped memory for _cuba_lif_step.1']
    #allocation4 [shape = 's32[1]{0}', space=sflag, size = 0x4, scoped, tag = 'scoped memory for _cuba_lif_step.1']
    #allocation5 [shape = 'u8[4096]{0}', space=vmem, size = 0x1000, scoped, tag = 'input window, operand 1, single buffered']
    #allocation6 [shape = 's32[1]{0}', space=sflag, size = 0x4, scoped, tag = 'scoped memory for _cuba_lif_step.1']
    #allocation7 [shape = 'u8[4096]{0}', space=vmem, size = 0x1000, scoped, tag = 'input window, operand 2, single buffered']
    #allocation8 [shape = 'u8[4096]{0}', space=vmem, size = 0x1000, scoped, tag = 'input window, operand 3, single buffered']
    #allocation9 [shape = 's32[1]{0}', space=sflag, size = 0x4, scoped, tag = 'scoped memory for _cuba_lif_step.1']
    #allocation10 [shape = 'u8[1024]{0}', space=vmem, size = 0x400, scoped, tag = 'output window, operand 0, single buffered']
    #allocation11 [shape = 'u8[4096]{0}', space=vmem, size = 0x1000, scoped, tag = 'output window, operand 1, single buffered']
    #allocation12 [shape = 's32[1]{0}', space=sflag, size = 0x4, scoped, tag = 'scoped memory for _cuba_lif_step.1']
    #allocation13 [shape = 'u8[4096]{0}', space=vmem, size = 0x1000, scoped, tag = 'output window, operand 2, single buffered']
    %12 = vsyncpa [#allocation3], 0
    %13 = vsyncpa [#allocation6], 0
    %14 = vsyncpa [#allocation9], 0
    %15 = vsyncpa [#allocation4], 0
    %16 = vsyncpa [#allocation12], 0
    // Predicated region
    $region2: #{_cuba_lif_step.1} parent=1 // pred_check
      _
    $region3: #{_cuba_lif_step.1} parent=1 // pred_check_branch
      %18 = sbr.rel (0) target = $region5
    $region4: #{_cuba_lif_step.1} parent=1 // pred_region
      %s20 = ssub.s32 128, 128
      %21 = vsyncadd [#allocation3], %s20
      %s23 = sshll.u32 [#allocation2], 4
      %s24 = int_to_ptr.vmem [resolvable:$true] %s23
      %26 = dma.hbm_to_vmem [thread:$0]  %s0, 128, %s24, [#allocation3]
    $region5: #{_cuba_lif_step.1} parent=1 // pred_fallthru
      _
    // Predicated region
    $region6: #{_cuba_lif_step.1} parent=1 // pred_check
      _
    $region7: #{_cuba_lif_step.1} parent=1 // pred_check_branch
      %28 = sbr.rel (0) target = $region9
    $region8: #{_cuba_lif_step.1} parent=1 // pred_region
      %s30 = ssub.s32 128, 128
      %31 = vsyncadd [#allocation6], %s30
      %s33 = sshll.u32 [#allocation5], 4
      %s34 = int_to_ptr.vmem [resolvable:$true] %s33
      %36 = dma.hbm_to_vmem [thread:$0]  %s1, 128, %s34, [#allocation6]
    $region9: #{_cuba_lif_step.1} parent=1 // pred_fallthru
      _
    // Predicated region
    $region10: #{_cuba_lif_step.1} parent=1 // pred_check
      _
    $region11: #{_cuba_lif_step.1} parent=1 // pred_check_branch
      %38 = sbr.rel (0) target = $region13
    $region12: #{_cuba_lif_step.1} parent=1 // pred_region
      %s40 = ssub.s32 128, 128
      %41 = vsyncadd [#allocation6], %s40
      %s43 = sshll.u32 [#allocation7], 4
      %s44 = int_to_ptr.vmem [resolvable:$true] %s43
      %46 = dma.hbm_to_vmem [thread:$0]  %s2, 128, %s44, [#allocation6]
    $region13: #{_cuba_lif_step.1} parent=1 // pred_fallthru
      _
    // Predicated region
    $region14: #{_cuba_lif_step.1} parent=1 // pred_check
      _
    $region15: #{_cuba_lif_step.1} parent=1 // pred_check_branch
      %48 = sbr.rel (0) target = $region17
    $region16: #{_cuba_lif_step.1} parent=1 // pred_region
      %s50 = ssub.s32 128, 128
      %51 = vsyncadd [#allocation9], %s50
      %s53 = sshll.u32 [#allocation8], 4
      %s54 = int_to_ptr.vmem [resolvable:$true] %s53
      %56 = dma.hbm_to_vmem [thread:$0]  %s3, 128, %s54, [#allocation9]
    $region17: #{_cuba_lif_step.1} parent=1 // pred_fallthru
      _
    // Predicated region
    $region18: #{_cuba_lif_step.1} parent=1 // pred_check
      _
    $region19: #{_cuba_lif_step.1} parent=1 // pred_check_branch
      %58 = sbr.rel (0) target = $region21
    $region20: #{_cuba_lif_step.1} parent=1 // pred_region
      %59 = dma.done [#allocation3], 128
    $region21: #{_cuba_lif_step.1} parent=1 // pred_fallthru
      _
    // Predicated region
    $region22: #{_cuba_lif_step.1} parent=1 // pred_check
      _
    $region23: #{_cuba_lif_step.1} parent=1 // pred_check_branch
      %61 = sbr.rel (0) target = $region25
    $region24: #{_cuba_lif_step.1} parent=1 // pred_region
      %62 = dma.done [#allocation6], 128
    $region25: #{_cuba_lif_step.1} parent=1 // pred_fallthru
      _
    // Predicated region
    $region26: #{_cuba_lif_step.1} parent=1 // pred_check
      _
    $region27: #{_cuba_lif_step.1} parent=1 // pred_check_branch
      %64 = sbr.rel (0) target = $region29
    $region28: #{_cuba_lif_step.1} parent=1 // pred_region
      %65 = dma.done [#allocation6], 128
    $region29: #{_cuba_lif_step.1} parent=1 // pred_fallthru
      _
    // Predicated region
    $region30: #{_cuba_lif_step.1} parent=1 // pred_check
      _
    $region31: #{_cuba_lif_step.1} parent=1 // pred_check_branch
      %67 = sbr.rel (0) target = $region33
    $region32: #{_cuba_lif_step.1} parent=1 // pred_region
      %68 = dma.done [#allocation9], 128
    $region33: #{_cuba_lif_step.1} parent=1 // pred_fallthru
      _
    %v71 = vld [vmem:[#allocation2] sm:$0xff]
    %v72 = vld [vmem:[#allocation5] sm:$0xff]
    %v73 = vld [vmem:[#allocation7] sm:$0xff]
    %v74 = vld [vmem:[#allocation8] sm:$0x1]
    %v75 = vld [vmem:[#allocation8 + $0x1] sm:$0x1]
    %v76 = vld [vmem:[#allocation8 + $0x2] sm:$0x1]
    %v77 = vld [vmem:[#allocation8 + $0x3] sm:$0x1]
    %v78 = vld [vmem:[#allocation8 + $0x4] sm:$0x1]
    %v79 = vld [vmem:[#allocation8 + $0x5] sm:$0x1]
    %v80 = vld [vmem:[#allocation8 + $0x6] sm:$0x1]
    %v81 = vld [vmem:[#allocation8 + $0x7] sm:$0x1]
    %v82 = vlaneseq
    %v83 = vshrl.u32 %v82, 7
    %v84 = vsub.s32 0, %v83
    %v85 = vrot.slane %v74, %v84
    %v86 = vmul.f32 %v85, %v72
    %v87 = vlaneseq
    %v88 = vshrl.u32 %v87, 7
    %v89 = vsub.s32 0, %v88
    %v90 = vrot.slane %v76, %v89
    %v91 = vmul.f32 %v90, %v71
    %v92 = vadd.f32 %v86, %v91
    %v93 = vlaneseq
    %v94 = vshrl.u32 %v93, 7
    %v95 = vsub.s32 0, %v94
    %v96 = vrot.slane %v75, %v95
    %v97 = vadd.f32 %v92, %v96
    %v98 = vlaneseq
    %v99 = vshrl.u32 %v98, 7
    %v100 = vsub.s32 0, %v99
    %v101 = vrot.slane %v77, %v100
    %v102 = vmul.f32 %v101, %v73
    %v103 = vlaneseq
    %v104 = vshrl.u32 %v103, 7
    %v105 = vsub.s32 0, %v104
    %v106 = vrot.slane %v79, %v105
    %v107 = vmul.f32 %v106, %v97
    %v108 = vadd.f32 %v102, %v107
    %v109 = vlaneseq
    %v110 = vshrl.u32 %v109, 7
    %v111 = vsub.s32 0, %v110
    %v112 = vrot.slane %v78, %v111
    %v113 = vadd.f32 %v108, %v112
    %v114 = vlaneseq
    %v115 = vshrl.u32 %v114, 7
    %v116 = vsub.s32 0, %v115
    %v117 = vrot.slane %v80, %v116
    %vm118 = vcmp.gt.f32.partialorder %v113, %v117
    %vm119 = vmpackc.low %vm118, %vm118
    %vm120 = vmpackc.even %vm119, %vm119
    %v121 = vsel %vm120, 16843009, 0
    %122 = vst [vmem:[#allocation10] sm:$0x3] %v121
    %123 = vst [vmem:[#allocation11] sm:$0xff] %v97
    %v124 = vlaneseq
    %v125 = vshrl.u32 %v124, 7
    %v126 = vsub.s32 0, %v125
    %v127 = vrot.slane %v81, %v126
    %v128 = vsel %vm118, %v127, %v113
    %129 = vst [vmem:[#allocation13] sm:$0xff] %v128
    // Predicated region
    $region34: #{_cuba_lif_step.1} parent=1 // pred_check
      _
    $region35: #{_cuba_lif_step.1} parent=1 // pred_check_branch
      %131 = sbr.rel (0) target = $region37
    $region36: #{_cuba_lif_step.1} parent=1 // pred_region
      %s133 = ssub.s32 32, 32
      %134 = vsyncadd [#allocation4], %s133
      %s136 = sshll.u32 [#allocation10], 4
      %s137 = int_to_ptr.vmem [resolvable:$true] %s136
      %139 = dma.vmem_to_hbm [thread:$0]  %s137, 32, %s4, [#allocation4]
    $region37: #{_cuba_lif_step.1} parent=1 // pred_fallthru
      _
    // Predicated region
    $region38: #{_cuba_lif_step.1} parent=1 // pred_check
      _
    $region39: #{_cuba_lif_step.1} parent=1 // pred_check_branch
      %141 = sbr.rel (0) target = $region41
    $region40: #{_cuba_lif_step.1} parent=1 // pred_region
      %s143 = ssub.s32 128, 128
      %144 = vsyncadd [#allocation12], %s143
      %s146 = sshll.u32 [#allocation11], 4
      %s147 = int_to_ptr.vmem [resolvable:$true] %s146
      %149 = dma.vmem_to_hbm [thread:$0]  %s147, 128, %s5, [#allocation12]
    $region41: #{_cuba_lif_step.1} parent=1 // pred_fallthru
      _
    // Predicated region
    $region42: #{_cuba_lif_step.1} parent=1 // pred_check
      _
    $region43: #{_cuba_lif_step.1} parent=1 // pred_check_branch
      %151 = sbr.rel (0) target = $region45
    $region44: #{_cuba_lif_step.1} parent=1 // pred_region
      %s153 = ssub.s32 128, 128
      %154 = vsyncadd [#allocation12], %s153
      %s156 = sshll.u32 [#allocation13], 4
      %s157 = int_to_ptr.vmem [resolvable:$true] %s156
      %159 = dma.vmem_to_hbm [thread:$0]  %s157, 128, %s6, [#allocation12]
    $region45: #{_cuba_lif_step.1} parent=1 // pred_fallthru
      _
    // Predicated region
    $region46: #{_cuba_lif_step.1} parent=1 // pred_check
      _
    $region47: #{_cuba_lif_step.1} parent=1 // pred_check_branch
      %161 = sbr.rel (0) target = $region49
    $region48: #{_cuba_lif_step.1} parent=1 // pred_region
      %162 = dma.done [#allocation4], 32
    $region49: #{_cuba_lif_step.1} parent=1 // pred_fallthru
      _
    // Predicated region
    $region50: #{_cuba_lif_step.1} parent=1 // pred_check
      _
    $region51: #{_cuba_lif_step.1} parent=1 // pred_check_branch
      %164 = sbr.rel (0) target = $region53
    $region52: #{_cuba_lif_step.1} parent=1 // pred_region
      %165 = dma.done [#allocation12], 128
    $region53: #{_cuba_lif_step.1} parent=1 // pred_fallthru
      _
    // Predicated region
    $region54: #{_cuba_lif_step.1} parent=1 // pred_check
      _
    $region55: #{_cuba_lif_step.1} parent=1 // pred_check_branch
      %167 = sbr.rel (0) target = $region57
    $region56: #{_cuba_lif_step.1} parent=1 // pred_region
      %168 = dma.done [#allocation12], 128
    $region57: #{_cuba_lif_step.1} parent=1 // pred_fallthru
      _
    %169 = vsyncpa [#allocation3], 1
    %170 = vsyncpa [#allocation6], 1
    %171 = vsyncpa [#allocation9], 1
    %172 = vsyncpa [#allocation4], 1
    %173 = vsyncpa [#allocation12], 1

</llo_original>
